<compile_context>
chip_gen: v6e
topology: v6e:2x2x1
jax: 0.10.0
libtpu: 0.0.40
codegen_flags: <defaults>
</compile_context>

<pallas_src>
import functools

import jax
import jax.numpy as jnp
from jax.experimental import pallas as pl
from jax.experimental.pallas import tpu as pltpu


def _round_up(x, m):
    return ((x + m - 1) // m) * m


def _encoder_kernel(x_ref, w1_ref, b1_ref, w2_ref, b2_ref, wh_ref, bh_ref,
                    out_ref, acc_ref):
    """Grid = (batch tiles, K tiles of the fc_1 contraction).

    fc_1 accumulates over the K axis into an f32 VMEM scratch; on the last K
    step the rest of the net (leaky -> fc_2 -> leaky -> fused heads) runs and
    the fused [mean | log_var] block is stored once.
    """
    k = pl.program_id(1)

    @pl.when(k == 0)
    def _():
        acc_ref[...] = jnp.zeros_like(acc_ref)

    # bf16 x bf16 -> f32 accumulate (single-pass MXU).
    acc_ref[...] += jnp.dot(x_ref[...], w1_ref[...],
                            preferred_element_type=jnp.float32)

    @pl.when(k == pl.num_programs(1) - 1)
    def _():
        h = acc_ref[...] + b1_ref[...]
        h = jnp.where(h > 0, h, 0.2 * h)
        h = jnp.dot(h.astype(jnp.bfloat16), w2_ref[...],
                    preferred_element_type=jnp.float32) + b2_ref[...]
        h = jnp.where(h > 0, h, 0.2 * h)
        out = jnp.dot(h.astype(jnp.bfloat16), wh_ref[...],
                      preferred_element_type=jnp.float32) + bh_ref[...]
        out_ref[...] = out.astype(out_ref.dtype)


def init_encoder_params(key, input_dim, hidden_dim, latent_dim, dtype=jnp.float32):
    """Deterministic init mimicking nn.Linear default: U(-1/sqrt(fan_in), ...).
    Weights stored as (in_features, out_features)."""
    def linear(k, fan_in, fan_out):
        kw, kb = jax.random.split(k)
        bound = 1.0 / jnp.sqrt(jnp.array(fan_in, dtype))
        w = jax.random.uniform(kw, (fan_in, fan_out), dtype, -bound, bound)
        b = jax.random.uniform(kb, (1, fan_out), dtype, -bound, bound)
        return w, b

    k1, k2, k3, k4 = jax.random.split(key, 4)
    w1, b1 = linear(k1, input_dim, hidden_dim)
    w2, b2 = linear(k2, hidden_dim, hidden_dim)
    wm, bm = linear(k3, hidden_dim, latent_dim)
    wv, bv = linear(k4, hidden_dim, latent_dim)
    return dict(w1=w1, b1=b1, w2=w2, b2=b2, wm=wm, bm=bm, wv=wv, bv=bv)


def prepare_encoder_params(params):
    """ONE-TIME weight prep (hoisted out of the per-step forward):
    zero-pad to lane-dense shapes, fuse the two heads into one [mean|log_var]
    output block, and cast the big weight matrices to bf16 (biases stay f32).
    Padded regions are exact zeros *after* the cast, so padded rows/columns
    contribute nothing (and leaky(0) == 0 keeps padded hidden lanes at 0)."""
    D, H = params["w1"].shape
    L = params["wm"].shape[1]

    # 256-wide MXUs (v6e/v7x) prefer N-multiples of 256 once the hidden dim is
    # large; keep 128 for tiny hidden dims (also optimal on v5e).
    align = 256 if H >= 256 else 128
    Dp = _round_up(D, 128)
    Hp = _round_up(max(H, 128), align)
    Op = _round_up(max(2 * L, 128), align)

    def padw(w, rows, cols):
        return (jnp.zeros((rows, cols), jnp.bfloat16)
                .at[:w.shape[0], :w.shape[1]].set(w.astype(jnp.bfloat16)))

    w1 = padw(params["w1"], Dp, Hp)
    w2 = padw(params["w2"], Hp, Hp)
    wh = (jnp.zeros((Hp, Op), jnp.bfloat16)
          .at[:H, :L].set(params["wm"].astype(jnp.bfloat16))
          .at[:H, L:2 * L].set(params["wv"].astype(jnp.bfloat16)))

    b1 = jnp.zeros((1, Hp), jnp.float32).at[:, :H].set(params["b1"])
    b2 = jnp.zeros((1, Hp), jnp.float32).at[:, :H].set(params["b2"])
    bh = (jnp.zeros((1, Op), jnp.float32)
          .at[:, :L].set(params["bm"])
          .at[:, L:2 * L].set(params["bv"]))
    return dict(w1=w1, b1=b1, w2=w2, b2=b2, wh=wh, bh=bh)


@functools.partial(jax.jit, static_argnames=("latent_dim",))
def encoder_forward(x, prep, latent_dim):
    """x: [B, C, H, W] (or any [B, ...]); prep: output of prepare_encoder_params.
    Returns (mean, log_var), each [B, latent_dim]."""
    B = x.shape[0]
    xf = x.reshape(B, -1)                 # torch.flatten(x, 1)
    D = xf.shape[1]
    L = latent_dim

    Dp, Hp = prep["w1"].shape
    Op = prep["wh"].shape[1]
    assert D <= Dp and 2 * L <= Op

    # ---- K tiling of the fc_1 contraction (v7x 64 MiB VMEM safety). --------
    # Largest multiple-of-128 divisor of Dp whose bf16 w1 tile fits ~12 MiB.
    w1_tile_budget = 12 * 1024 * 1024
    n = Dp // 128
    d_best = 1
    for d in range(1, n + 1):
        if n % d == 0 and d * 128 * Hp * 2 <= w1_tile_budget:
            d_best = d
    TK = 128 * d_best
    Kt = Dp // TK

    # ---- Batch tile sized by bytes: target ~4 MiB of bf16 x per grid step. --
    rows = (4 * 1024 * 1024 // (TK * 2)) // 8 * 8
    rows = int(min(max(rows, 8), 1024))
    if B <= rows:
        TB, Bp = B, B                     # single batch tile: block == full dim, no row pad
    else:
        TB = rows
        Bp = _round_up(B, TB)

    # ---- x crosses HBM once: bf16 cast, pad only when actually required. ---
    xb = xf.astype(jnp.bfloat16)
    if Bp != B or Dp != D:
        xb = jnp.pad(xb, ((0, Bp - B), (0, Dp - D)))   # fuses with the cast

    grid = (Bp // TB, Kt)

    def resident(shape):
        # Grid-invariant block: DMA'd once, single-buffered (halves weight VMEM).
        return pl.BlockSpec(shape, lambda i, k: (0, 0),
                            pipeline_mode=pl.Buffered(1))

    if Kt == 1:
        w1_spec = pl.BlockSpec((TK, Hp), lambda i, k: (k, 0),
                               pipeline_mode=pl.Buffered(1))
    else:
        w1_spec = pl.BlockSpec((TK, Hp), lambda i, k: (k, 0))  # default double-buffer

    # ---- VMEM limit from the actual footprint (+30%), capped for v7x. ------
    vmem_bytes = (2 * TB * TK * 2                         # x tiles (double-buffered)
                  + (1 if Kt == 1 else 2) * TK * Hp * 2   # w1 tile(s)
                  + Hp * Hp * 2 + Hp * Op * 2             # w2, wh (single-buffered)
                  + 2 * 8 * Hp * 4 + 8 * Op * 4           # biases (sublane-padded f32)
                  + 2 * TB * Op * 4                       # out tiles (double-buffered)
                  + TB * Hp * 4)                          # fc_1 accumulator scratch
    vmem_limit = int(min(max(int(vmem_bytes * 1.3), 16 * 1024 * 1024),
                         48 * 1024 * 1024))

    # Post-bf16 reality: what the kernel actually computes / moves.
    flops = 2 * Bp * (Dp * Hp + Hp * Hp + Hp * Op)
    bytes_accessed = (Bp * Dp * 2 + Bp * Op * 4
                      + (Dp * Hp + Hp * Hp + Hp * Op) * 2
                      + (2 * Hp + Op) * 4)

    out = pl.pallas_call(
        _encoder_kernel,
        out_shape=jax.ShapeDtypeStruct((Bp, Op), jnp.float32),
        grid=grid,
        in_specs=[
            pl.BlockSpec((TB, TK), lambda i, k: (i, k)),   # streamed x tiles
            w1_spec,                                       # fc_1 weight (K-tiled)
            resident((1, Hp)),                             # fc_1 bias
            resident((Hp, Hp)), resident((1, Hp)),         # fc_2
            resident((Hp, Op)), resident((1, Op)),         # fused heads [mean|log_var]
        ],
        out_specs=pl.BlockSpec((TB, Op), lambda i, k: (i, 0)),
        scratch_shapes=[pltpu.VMEM((TB, Hp), jnp.float32)],
        compiler_params=pltpu.CompilerParams(
            dimension_semantics=("parallel", "arbitrary"),
            vmem_limit_bytes=vmem_limit,
        ),
        cost_estimate=pl.CostEstimate(
            flops=flops, transcendentals=0, bytes_accessed=bytes_accessed),
    )(xb, prep["w1"], prep["b1"], prep["w2"], prep["b2"],
      prep["wh"], prep["bh"])

    mean = out[:B, :L]
    log_var = out[:B, L:2 * L]
    return mean, log_var


def _reference_forward(x, params):
    """Pure-JAX f32 reference of the PyTorch forward, for correctness check."""
    B = x.shape[0]
    h = x.reshape(B, -1).astype(jnp.float32)
    h = h @ params["w1"] + params["b1"]
    h = jnp.where(h > 0, h, 0.2 * h)
    h = h @ params["w2"] + params["b2"]
    h = jnp.where(h > 0, h, 0.2 * h)
    mean = h @ params["wm"] + params["bm"]
    log_var = h @ params["wv"] + params["bv"]
    return mean, log_var


if __name__ == "__main__":
    # Small shapes consistent with the module: x = [B, C, H, W], input_dim = C*H*W.
    B, C, H, W = 2, 4, 16, 16
    input_dim = C * H * W        # 1024
    hidden_dim = 32
    latent_dim = 8

    key = jax.random.PRNGKey(0)
    kx, kp = jax.random.split(key)
    x = jax.random.normal(kx, (B, C, H, W), jnp.float32)
    params = init_encoder_params(kp, input_dim, hidden_dim, latent_dim)
    prep = prepare_encoder_params(params)      # one-time weight prep (hoisted)

    mean, log_var = encoder_forward(x, prep, latent_dim)
    jax.block_until_ready((mean, log_var))

    ref_mean, ref_log_var = _reference_forward(x, params)
    assert mean.shape == (B, latent_dim) and log_var.shape == (B, latent_dim)
    # bf16 inputs/weights with f32 accumulation -> loosened tolerance vs f32 ref.
    assert jnp.allclose(mean, ref_mean, atol=5e-2, rtol=5e-2)
    assert jnp.allclose(log_var, ref_log_var, atol=5e-2, rtol=5e-2)

    print("KERNEL_OK")
</pallas_src>

<mosaic_0001>
module attributes {stable_mosaic.version = 11 : i64} {
  func.func @_encoder_kernel(%arg0: i32, %arg1: i32, %arg2: memref<2x1024xbf16, #tpu.memory_space<vmem>>, %arg3: memref<1024x128xbf16, #tpu.memory_space<vmem>>, %arg4: memref<1x128xf32, #tpu.memory_space<vmem>>, %arg5: memref<128x128xbf16, #tpu.memory_space<vmem>>, %arg6: memref<1x128xf32, #tpu.memory_space<vmem>>, %arg7: memref<128x128xbf16, #tpu.memory_space<vmem>>, %arg8: memref<1x128xf32, #tpu.memory_space<vmem>>, %arg9: memref<2x128xf32, #tpu.memory_space<vmem>>, %arg10: memref<2x128xf32, #tpu.memory_space<vmem>>) attributes {dimension_semantics = [#tpu.dimension_semantics<parallel>, #tpu.dimension_semantics<arbitrary>], iteration_bounds = array<i64: 1, 1>, scalar_prefetch = 0 : i64, scratch_operands = 1 : i64, tpu.core_type = #tpu.core_type<tc>, window_params = [{transform_indices = @transform_0, window_bounds = array<i64: 2, 1024>}, {pipeline_mode = #tpu.pipeline_mode<synchronous>, transform_indices = @transform_1, window_bounds = array<i64: 1024, 128>}, {pipeline_mode = #tpu.pipeline_mode<synchronous>, transform_indices = @transform_2, window_bounds = array<i64: 1, 128>}, {pipeline_mode = #tpu.pipeline_mode<synchronous>, transform_indices = @transform_3, window_bounds = array<i64: 128, 128>}, {pipeline_mode = #tpu.pipeline_mode<synchronous>, transform_indices = @transform_4, window_bounds = array<i64: 1, 128>}, {pipeline_mode = #tpu.pipeline_mode<synchronous>, transform_indices = @transform_5, window_bounds = array<i64: 128, 128>}, {pipeline_mode = #tpu.pipeline_mode<synchronous>, transform_indices = @transform_6, window_bounds = array<i64: 1, 128>}, {transform_indices = @transform_7, window_bounds = array<i64: 2, 128>}]} {
    %c0_i32 = arith.constant 0 : i32
    %0 = arith.cmpi eq, %arg1, %c0_i32 : i32
    %1 = arith.extui %0 : i1 to i32
    %c0_i32_0 = arith.constant 0 : i32
    %2 = arith.cmpi ne, %1, %c0_i32_0 : i32
    scf.if %2 {
      %cst_10 = arith.constant 0.000000e+00 : f32
      %12 = vector.broadcast %cst_10 : f32 to vector<2x128xf32>
      %c0_11 = arith.constant 0 : index
      %c0_12 = arith.constant 0 : index
      %13 = vector.load %arg10[%c0_11, %c0_12] : memref<2x128xf32, #tpu.memory_space<vmem>>, vector<2x128xf32>
      tpu.vector_store %arg10[%c0_11, %c0_12], %12 {strides = array<i32>} : memref<2x128xf32, #tpu.memory_space<vmem>>, vector<2x128xf32>,
    } else {
    }
    %c0 = arith.constant 0 : index
    %c0_1 = arith.constant 0 : index
    %3 = vector.load %arg10[%c0, %c0_1] : memref<2x128xf32, #tpu.memory_space<vmem>>, vector<2x128xf32>
    %c0_2 = arith.constant 0 : index
    %c0_3 = arith.constant 0 : index
    %4 = vector.load %arg2[%c0_2, %c0_3] : memref<2x1024xbf16, #tpu.memory_space<vmem>>, vector<2x1024xbf16>
    %c0_4 = arith.constant 0 : index
    %c0_5 = arith.constant 0 : index
    %5 = vector.load %arg3[%c0_4, %c0_5] : memref<1024x128xbf16, #tpu.memory_space<vmem>>, vector<1024x128xbf16>
    %cst = arith.constant dense<0.000000e+00> : vector<2x128xf32>
    %6 = tpu.matmul %4, %5, %cst {dimension_numbers = #tpu.dot_dimension_numbers<[1], [0], [0], [1], [0, 0, 1, 1], [], []>} : vector<2x1024xbf16>, vector<1024x128xbf16>, vector<2x128xf32> -> vector<2x128xf32>
    %7 = arith.addf %3, %6 : vector<2x128xf32>
    %c0_6 = arith.constant 0 : index
    %c0_7 = arith.constant 0 : index
    %8 = vector.load %arg10[%c0_6, %c0_7] : memref<2x128xf32, #tpu.memory_space<vmem>>, vector<2x128xf32>
    tpu.vector_store %arg10[%c0_6, %c0_7], %7 {strides = array<i32>} : memref<2x128xf32, #tpu.memory_space<vmem>>, vector<2x128xf32>,
    %c0_i32_8 = arith.constant 0 : i32
    %9 = arith.cmpi eq, %arg1, %c0_i32_8 : i32
    %10 = arith.extui %9 : i1 to i32
    %c0_i32_9 = arith.constant 0 : i32
    %11 = arith.cmpi ne, %10, %c0_i32_9 : i32
    scf.if %11 {
      %c0_10 = arith.constant 0 : index
      %c0_11 = arith.constant 0 : index
      %12 = vector.load %arg10[%c0_10, %c0_11] : memref<2x128xf32, #tpu.memory_space<vmem>>, vector<2x128xf32>
      %c0_12 = arith.constant 0 : index
      %c0_13 = arith.constant 0 : index
      %13 = vector.load %arg4[%c0_12, %c0_13] : memref<1x128xf32, #tpu.memory_space<vmem>>, vector<1x128xf32>
      %14 = vector.broadcast %13 : vector<1x128xf32> to vector<2x128xf32>
      %15 = arith.addf %12, %14 : vector<2x128xf32>
      %cst_14 = arith.constant 0.000000e+00 : f32
      %16 = vector.broadcast %cst_14 : f32 to vector<2x128xf32>
      %17 = arith.cmpf ogt, %15, %16 : vector<2x128xf32>
      %cst_15 = arith.constant 2.000000e-01 : f32
      %18 = vector.broadcast %cst_15 : f32 to vector<2x128xf32>
      %19 = arith.mulf %18, %15 : vector<2x128xf32>
      %20 = arith.select %17, %15, %19 : vector<2x128xi1>, vector<2x128xf32>
      %21 = arith.truncf %20 : vector<2x128xf32> to vector<2x128xbf16>
      %c0_16 = arith.constant 0 : index
      %c0_17 = arith.constant 0 : index
      %22 = vector.load %arg5[%c0_16, %c0_17] : memref<128x128xbf16, #tpu.memory_space<vmem>>, vector<128x128xbf16>
      %cst_18 = arith.constant dense<0.000000e+00> : vector<2x128xf32>
      %23 = tpu.matmul %21, %22, %cst_18 {dimension_numbers = #tpu.dot_dimension_numbers<[1], [0], [0], [1], [0, 0, 1, 1], [], []>} : vector<2x128xbf16>, vector<128x128xbf16>, vector<2x128xf32> -> vector<2x128xf32>
      %c0_19 = arith.constant 0 : index
      %c0_20 = arith.constant 0 : index
      %24 = vector.load %arg6[%c0_19, %c0_20] : memref<1x128xf32, #tpu.memory_space<vmem>>, vector<1x128xf32>
      %25 = vector.broadcast %24 : vector<1x128xf32> to vector<2x128xf32>
      %26 = arith.addf %23, %25 : vector<2x128xf32>
      %cst_21 = arith.constant 0.000000e+00 : f32
      %27 = vector.broadcast %cst_21 : f32 to vector<2x128xf32>
      %28 = arith.cmpf ogt, %26, %27 : vector<2x128xf32>
      %cst_22 = arith.constant 2.000000e-01 : f32
      %29 = vector.broadcast %cst_22 : f32 to vector<2x128xf32>
      %30 = arith.mulf %29, %26 : vector<2x128xf32>
      %31 = arith.select %28, %26, %30 : vector<2x128xi1>, vector<2x128xf32>
      %32 = arith.truncf %31 : vector<2x128xf32> to vector<2x128xbf16>
      %c0_23 = arith.constant 0 : index
      %c0_24 = arith.constant 0 : index
      %33 = vector.load %arg7[%c0_23, %c0_24] : memref<128x128xbf16, #tpu.memory_space<vmem>>, vector<128x128xbf16>
      %cst_25 = arith.constant dense<0.000000e+00> : vector<2x128xf32>
      %34 = tpu.matmul %32, %33, %cst_25 {dimension_numbers = #tpu.dot_dimension_numbers<[1], [0], [0], [1], [0, 0, 1, 1], [], []>} : vector<2x128xbf16>, vector<128x128xbf16>, vector<2x128xf32> -> vector<2x128xf32>
      %c0_26 = arith.constant 0 : index
      %c0_27 = arith.constant 0 : index
      %35 = vector.load %arg8[%c0_26, %c0_27] : memref<1x128xf32, #tpu.memory_space<vmem>>, vector<1x128xf32>
      %36 = vector.broadcast %35 : vector<1x128xf32> to vector<2x128xf32>
      %37 = arith.addf %34, %36 : vector<2x128xf32>
      %c0_28 = arith.constant 0 : index
      %c0_29 = arith.constant 0 : index
      %38 = vector.load %arg9[%c0_28, %c0_29] : memref<2x128xf32, #tpu.memory_space<vmem>>, vector<2x128xf32>
      tpu.vector_store %arg9[%c0_28, %c0_29], %37 {strides = array<i32>} : memref<2x128xf32, #tpu.memory_space<vmem>>, vector<2x128xf32>,
    } else {
    }
    return
  }
  func.func @transform_0(%arg0: i32, %arg1: i32) -> (i32, i32) {
    %c0_i32 = arith.constant 0 : i32
    return %arg0, %arg1 : i32, i32
  }
  func.func @transform_1(%arg0: i32, %arg1: i32) -> (i32, i32) {
    %c0_i32 = arith.constant 0 : i32
    %c0_i32_0 = arith.constant 0 : i32
    return %arg1, %c0_i32 : i32, i32
  }
  func.func @transform_2(%arg0: i32, %arg1: i32) -> (i32, i32) {
    %c0_i32 = arith.constant 0 : i32
    %c0_i32_0 = arith.constant 0 : i32
    %c0_i32_1 = arith.constant 0 : i32
    return %c0_i32, %c0_i32_0 : i32, i32
  }
  func.func @transform_3(%arg0: i32, %arg1: i32) -> (i32, i32) {
    %c0_i32 = arith.constant 0 : i32
    %c0_i32_0 = arith.constant 0 : i32
    %c0_i32_1 = arith.constant 0 : i32
    return %c0_i32, %c0_i32_0 : i32, i32
  }
  func.func @transform_4(%arg0: i32, %arg1: i32) -> (i32, i32) {
    %c0_i32 = arith.constant 0 : i32
    %c0_i32_0 = arith.constant 0 : i32
    %c0_i32_1 = arith.constant 0 : i32
    return %c0_i32, %c0_i32_0 : i32, i32
  }
  func.func @transform_5(%arg0: i32, %arg1: i32) -> (i32, i32) {
    %c0_i32 = arith.constant 0 : i32
    %c0_i32_0 = arith.constant 0 : i32
    %c0_i32_1 = arith.constant 0 : i32
    return %c0_i32, %c0_i32_0 : i32, i32
  }
  func.func @transform_6(%arg0: i32, %arg1: i32) -> (i32, i32) {
    %c0_i32 = arith.constant 0 : i32
    %c0_i32_0 = arith.constant 0 : i32
    %c0_i32_1 = arith.constant 0 : i32
    return %c0_i32, %c0_i32_0 : i32, i32
  }
  func.func @transform_7(%arg0: i32, %arg1: i32) -> (i32, i32) {
    %c0_i32 = arith.constant 0 : i32
    %c0_i32_0 = arith.constant 0 : i32
    return %arg0, %c0_i32 : i32, i32
  }
}

</mosaic_0001>

<llo_original>
// kernel: encoder_forward.1
$region0: #{encoder_forward.1}
  #allocation0 [shape = 'u32[]', space=smem, size = 0x4, offset = 0x4, fixed_abs, tag = 'smem constant byte address 0x4 - core index']
  #allocation1 [shape = 'u32[144,128]{1,0:T(1,128)}', space=vmem, size = 0x12000, scoped, tag = 'internal scratch']
  #allocation2 [shape = 'f32[2,128]{1,0:T(2,128)}', space=vmem, size = 0x400, scoped, tag = 'scratch operand']
  %s0 = inlined_call_operand.vmem [shape: bf16[2,1024], index: 0, kind: input, shape index: {}]
  %s1 = inlined_call_operand.hbm [shape: bf16[1024,128], index: 1, kind: input, shape index: {}]
  %s2 = inlined_call_operand.vmem [shape: f32[1,128], index: 2, kind: input, shape index: {}]
  %s3 = inlined_call_operand.vmem [shape: bf16[128,128], index: 3, kind: input, shape index: {}]
  %s4 = inlined_call_operand.vmem [shape: f32[1,128], index: 4, kind: input, shape index: {}]
  %s5 = inlined_call_operand.vmem [shape: bf16[128,128], index: 5, kind: input, shape index: {}]
  %s6 = inlined_call_operand.vmem [shape: f32[1,128], index: 6, kind: input, shape index: {}]
  %s7 = inlined_call_operand.vmem [shape: f32[2,128], index: 7, kind: output, shape index: {}]
  %s8 = sld [smem:[#allocation0]]
  $region50: #{encoder_forward.1} parent=0
    _
  %s10 = ssub.s32 1, %s8
  %s11 = scalar_select 0, %s10, %s8
  $region1: #{encoder_forward.1} parent=0
    #allocation3 [shape = 'u8[262144]{0}', space=vmem, size = 0x40000, scoped, tag = 'input window, operand 1, single buffered']
    #allocation4 [shape = 's32[1]{0}', space=sflag, size = 0x4, scoped, tag = 'scoped memory for encoder_forward.1']
    %12 = vsyncpa [#allocation4], 0
    // Predicated region
    $region2: #{encoder_forward.1} parent=1 // pred_check
      _
    $region3: #{encoder_forward.1} parent=1 // pred_check_branch
      %14 = sbr.rel (0) target = $region5
    $region4: #{encoder_forward.1} parent=1 // pred_region
      _
    $region5: #{encoder_forward.1} parent=1 // pred_fallthru
      _
    // Predicated region
    $region6: #{encoder_forward.1} parent=1 // pred_check
      _
    $region7: #{encoder_forward.1} parent=1 // pred_check_branch
      %16 = sbr.rel (0) target = $region9
    $region8: #{encoder_forward.1} parent=1 // pred_region
      %s18 = ssub.s32 8192, 8192
      %19 = vsyncadd [#allocation4], %s18
      %s20 = sshll.u32 [#allocation3], 4
      %s21 = int_to_ptr.vmem [resolvable:$true] %s20
      %26 = dma.hbm_to_vmem [thread:$0]  %s1, 8192, %s21, [#allocation4], 64, 64, 4
    $region9: #{encoder_forward.1} parent=1 // pred_fallthru
      _
    // Predicated region
    $region10: #{encoder_forward.1} parent=1 // pred_check
      _
    $region11: #{encoder_forward.1} parent=1 // pred_check_branch
      %28 = sbr.rel (0) target = $region13
    $region12: #{encoder_forward.1} parent=1 // pred_region
      _
    $region13: #{encoder_forward.1} parent=1 // pred_fallthru
      _
    // Predicated region
    $region14: #{encoder_forward.1} parent=1 // pred_check
      _
    $region15: #{encoder_forward.1} parent=1 // pred_check_branch
      %30 = sbr.rel (0) target = $region17
    $region16: #{encoder_forward.1} parent=1 // pred_region
      _
    $region17: #{encoder_forward.1} parent=1 // pred_fallthru
      _
    // Predicated region
    $region18: #{encoder_forward.1} parent=1 // pred_check
      _
    $region19: #{encoder_forward.1} parent=1 // pred_check_branch
      %32 = sbr.rel (0) target = $region21
    $region20: #{encoder_forward.1} parent=1 // pred_region
      _
    $region21: #{encoder_forward.1} parent=1 // pred_fallthru
      _
    // Predicated region
    $region22: #{encoder_forward.1} parent=1 // pred_check
      _
    $region23: #{encoder_forward.1} parent=1 // pred_check_branch
      %34 = sbr.rel (0) target = $region25
    $region24: #{encoder_forward.1} parent=1 // pred_region
      _
    $region25: #{encoder_forward.1} parent=1 // pred_fallthru
      _
    // Predicated region
    $region26: #{encoder_forward.1} parent=1 // pred_check
      _
    $region27: #{encoder_forward.1} parent=1 // pred_check_branch
      %36 = sbr.rel (0) target = $region29
    $region28: #{encoder_forward.1} parent=1 // pred_region
      _
    $region29: #{encoder_forward.1} parent=1 // pred_fallthru
      _
    // Predicated region
    $region30: #{encoder_forward.1} parent=1 // pred_check
      _
    $region31: #{encoder_forward.1} parent=1 // pred_check_branch
      %38 = sbr.rel (0) target = $region33
    $region32: #{encoder_forward.1} parent=1 // pred_region
      %39 = dma.done [#allocation4], 8192
    $region33: #{encoder_forward.1} parent=1 // pred_fallthru
      _
    %p41 = scmp.eq.s32.totalorder 0, 0
    // Predicated region
    $region34: #{encoder_forward.1} parent=1 // pred_check
      %p42 = pneg %p41
    $region35: #{encoder_forward.1} parent=1 // pred_check_branch
      %44 = sbr.rel (%p42) target = $region37
    $region36: #{encoder_forward.1} parent=1 // pred_region
      %45 = vst [vmem:[#allocation2] sm:$0x3] 0.0
    $region37: #{encoder_forward.1} parent=1 // pred_fallthru
      _
    %v46 = vld [vmem:[#allocation2] sm:$0x3]
    %v47 = vld [vmem:[%s0] sm:$0xff]
    %v48 = vld [vmem:[#allocation3] sm:$0xf]
    %v49 = vld [vmem:[#allocation3 + $0x4] sm:$0xf]
    %v50 = vld [vmem:[#allocation3 + $0x8] sm:$0xf]
    %v51 = vld [vmem:[#allocation3 + $0xc] sm:$0xf]
    %v52 = vld [vmem:[#allocation3 + $0x10] sm:$0xf]
    %v53 = vld [vmem:[#allocation3 + $0x14] sm:$0xf]
    %v54 = vld [vmem:[#allocation3 + $0x18] sm:$0xf]
    %v55 = vld [vmem:[#allocation3 + $0x1c] sm:$0xf]
    %v56 = vld [vmem:[#allocation3 + $0x20] sm:$0xf]
    %v57 = vld [vmem:[#allocation3 + $0x24] sm:$0xf]
    %v58 = vld [vmem:[#allocation3 + $0x28] sm:$0xf]
    %v59 = vld [vmem:[#allocation3 + $0x2c] sm:$0xf]
    %v60 = vld [vmem:[#allocation3 + $0x30] sm:$0xf]
    %v61 = vld [vmem:[#allocation3 + $0x34] sm:$0xf]
    %v62 = vld [vmem:[#allocation3 + $0x38] sm:$0xf]
    %v63 = vld [vmem:[#allocation3 + $0x3c] sm:$0xf]
    %v64 = vld [vmem:[#allocation3 + $0x40] sm:$0xf]
    %v65 = vld [vmem:[#allocation3 + $0x44] sm:$0xf]
    %v66 = vld [vmem:[#allocation3 + $0x48] sm:$0xf]
    %v67 = vld [vmem:[#allocation3 + $0x4c] sm:$0xf]
    %v68 = vld [vmem:[#allocation3 + $0x50] sm:$0xf]
    %v69 = vld [vmem:[#allocation3 + $0x54] sm:$0xf]
    %v70 = vld [vmem:[#allocation3 + $0x58] sm:$0xf]
    %v71 = vld [vmem:[#allocation3 + $0x5c] sm:$0xf]
    %v72 = vld [vmem:[#allocation3 + $0x60] sm:$0xf]
    %v73 = vld [vmem:[#allocation3 + $0x64] sm:$0xf]
    %v74 = vld [vmem:[#allocation3 + $0x68] sm:$0xf]
    %v75 = vld [vmem:[#allocation3 + $0x6c] sm:$0xf]
    %v76 = vld [vmem:[#allocation3 + $0x70] sm:$0xf]
    %v77 = vld [vmem:[#allocation3 + $0x74] sm:$0xf]
    %v78 = vld [vmem:[#allocation3 + $0x78] sm:$0xf]
    %v79 = vld [vmem:[#allocation3 + $0x7c] sm:$0xf]
    %v80 = vld [vmem:[#allocation3 + $0x80] sm:$0xf]
    %v81 = vld [vmem:[#allocation3 + $0x84] sm:$0xf]
    %v82 = vld [vmem:[#allocation3 + $0x88] sm:$0xf]
    %v83 = vld [vmem:[#allocation3 + $0x8c] sm:$0xf]
    %v84 = vld [vmem:[#allocation3 + $0x90] sm:$0xf]
    %v85 = vld [vmem:[#allocation3 + $0x94] sm:$0xf]
    %v86 = vld [vmem:[#allocation3 + $0x98] sm:$0xf]
    %v87 = vld [vmem:[#allocation3 + $0x9c] sm:$0xf]
    %v88 = vld [vmem:[#allocation3 + $0xa0] sm:$0xf]
    %v89 = vld [vmem:[#allocation3 + $0xa4] sm:$0xf]
    %v90 = vld [vmem:[#allocation3 + $0xa8] sm:$0xf]
    %v91 = vld [vmem:[#allocation3 + $0xac] sm:$0xf]
    %v92 = vld [vmem:[#allocation3 + $0xb0] sm:$0xf]
    %v93 = vld [vmem:[#allocation3 + $0xb4] sm:$0xf]
    %v94 = vld [vmem:[#allocation3 + $0xb8] sm:$0xf]
    %v95 = vld [vmem:[#allocation3 + $0xbc] sm:$0xf]
    %v96 = vld [vmem:[#allocation3 + $0xc0] sm:$0xf]
    %v97 = vld [vmem:[#allocation3 + $0xc4] sm:$0xf]
    %v98 = vld [vmem:[#allocation3 + $0xc8] sm:$0xf]
    %v99 = vld [vmem:[#allocation3 + $0xcc] sm:$0xf]
    %v100 = vld [vmem:[#allocation3 + $0xd0] sm:$0xf]
    %v101 = vld [vmem:[#allocation3 + $0xd4] sm:$0xf]
    %v102 = vld [vmem:[#allocation3 + $0xd8] sm:$0xf]
    %v103 = vld [vmem:[#allocation3 + $0xdc] sm:$0xf]
    %v104 = vld [vmem:[#allocation3 + $0xe0] sm:$0xf]
    %v105 = vld [vmem:[#allocation3 + $0xe4] sm:$0xf]
    %v106 = vld [vmem:[#allocation3 + $0xe8] sm:$0xf]
    %v107 = vld [vmem:[#allocation3 + $0xec] sm:$0xf]
    %v108 = vld [vmem:[#allocation3 + $0xf0] sm:$0xf]
    %v109 = vld [vmem:[#allocation3 + $0xf4] sm:$0xf]
    %v110 = vld [vmem:[#allocation3 + $0xf8] sm:$0xf]
    %v111 = vld [vmem:[#allocation3 + $0xfc] sm:$0xf]
    %v112 = vld [vmem:[#allocation3 + $0x100] sm:$0xf]
    %v113 = vld [vmem:[#allocation3 + $0x104] sm:$0xf]
    %v114 = vld [vmem:[#allocation3 + $0x108] sm:$0xf]
    %v115 = vld [vmem:[#allocation3 + $0x10c] sm:$0xf]
    %v116 = vld [vmem:[#allocation3 + $0x110] sm:$0xf]
    %v117 = vld [vmem:[#allocation3 + $0x114] sm:$0xf]
    %v118 = vld [vmem:[#allocation3 + $0x118] sm:$0xf]
    %v119 = vld [vmem:[#allocation3 + $0x11c] sm:$0xf]
    %v120 = vld [vmem:[#allocation3 + $0x120] sm:$0xf]
    %v121 = vld [vmem:[#allocation3 + $0x124] sm:$0xf]
    %v122 = vld [vmem:[#allocation3 + $0x128] sm:$0xf]
    %v123 = vld [vmem:[#allocation3 + $0x12c] sm:$0xf]
    %v124 = vld [vmem:[#allocation3 + $0x130] sm:$0xf]
    %v125 = vld [vmem:[#allocation3 + $0x134] sm:$0xf]
    %v126 = vld [vmem:[#allocation3 + $0x138] sm:$0xf]
    %v127 = vld [vmem:[#allocation3 + $0x13c] sm:$0xf]
    %v128 = vld [vmem:[#allocation3 + $0x140] sm:$0xf]
    %v129 = vld [vmem:[#allocation3 + $0x144] sm:$0xf]
    %v130 = vld [vmem:[#allocation3 + $0x148] sm:$0xf]
    %v131 = vld [vmem:[#allocation3 + $0x14c] sm:$0xf]
    %v132 = vld [vmem:[#allocation3 + $0x150] sm:$0xf]
    %v133 = vld [vmem:[#allocation3 + $0x154] sm:$0xf]
    %v134 = vld [vmem:[#allocation3 + $0x158] sm:$0xf]
    %v135 = vld [vmem:[#allocation3 + $0x15c] sm:$0xf]
    %v136 = vld [vmem:[#allocation3 + $0x160] sm:$0xf]
    %v137 = vld [vmem:[#allocation3 + $0x164] sm:$0xf]
    %v138 = vld [vmem:[#allocation3 + $0x168] sm:$0xf]
    %v139 = vld [vmem:[#allocation3 + $0x16c] sm:$0xf]
    %v140 = vld [vmem:[#allocation3 + $0x170] sm:$0xf]
    %v141 = vld [vmem:[#allocation3 + $0x174] sm:$0xf]
    %v142 = vld [vmem:[#allocation3 + $0x178] sm:$0xf]
    %v143 = vld [vmem:[#allocation3 + $0x17c] sm:$0xf]
    %v144 = vld [vmem:[#allocation3 + $0x180] sm:$0xf]
    %v145 = vld [vmem:[#allocation3 + $0x184] sm:$0xf]
    %v146 = vld [vmem:[#allocation3 + $0x188] sm:$0xf]
    %v147 = vld [vmem:[#allocation3 + $0x18c] sm:$0xf]
    %v148 = vld [vmem:[#allocation3 + $0x190] sm:$0xf]
    %v149 = vld [vmem:[#allocation3 + $0x194] sm:$0xf]
    %v150 = vld [vmem:[#allocation3 + $0x198] sm:$0xf]
    %v151 = vld [vmem:[#allocation3 + $0x19c] sm:$0xf]
    %v152 = vld [vmem:[#allocation3 + $0x1a0] sm:$0xf]
    %v153 = vld [vmem:[#allocation3 + $0x1a4] sm:$0xf]
    %v154 = vld [vmem:[#allocation3 + $0x1a8] sm:$0xf]
    %v155 = vld [vmem:[#allocation3 + $0x1ac] sm:$0xf]
    %v156 = vld [vmem:[#allocation3 + $0x1b0] sm:$0xf]
    %v157 = vld [vmem:[#allocation3 + $0x1b4] sm:$0xf]
    %v158 = vld [vmem:[#allocation3 + $0x1b8] sm:$0xf]
    %v159 = vld [vmem:[#allocation3 + $0x1bc] sm:$0xf]
    %v160 = vld [vmem:[#allocation3 + $0x1c0] sm:$0xf]
    %v161 = vld [vmem:[#allocation3 + $0x1c4] sm:$0xf]
    %v162 = vld [vmem:[#allocation3 + $0x1c8] sm:$0xf]
    %v163 = vld [vmem:[#allocation3 + $0x1cc] sm:$0xf]
    %v164 = vld [vmem:[#allocation3 + $0x1d0] sm:$0xf]
    %v165 = vld [vmem:[#allocation3 + $0x1d4] sm:$0xf]
    %v166 = vld [vmem:[#allocation3 + $0x1d8] sm:$0xf]
    %v167 = vld [vmem:[#allocation3 + $0x1dc] sm:$0xf]
    %v168 = vld [vmem:[#allocation3 + $0x1e0] sm:$0xf]
    %v169 = vld [vmem:[#allocation3 + $0x1e4] sm:$0xf]
    %v170 = vld [vmem:[#allocation3 + $0x1e8] sm:$0xf]
    %v171 = vld [vmem:[#allocation3 + $0x1ec] sm:$0xf]
    %v172 = vld [vmem:[#allocation3 + $0x1f0] sm:$0xf]
    %v173 = vld [vmem:[#allocation3 + $0x1f4] sm:$0xf]
    %v174 = vld [vmem:[#allocation3 + $0x1f8] sm:$0xf]
    %v175 = vld [vmem:[#allocation3 + $0x1fc] sm:$0xf]
    %v177 = vcombine.high %v47, %v47
    %v179 = vunpack.c.l.s4 1966171168
    %v180 = vunpack.c.0.s8 %v179
    %v181 = vlaneseq
    %v182 = vshrl.u32 %v181, 7
    %v183 = vsub.s32 %v180, %v182
    %v184 = vrot.slane %v47, %v183
    %v186 = vunpack.c.l.s4 1966171168
    %v187 = vunpack.c.0.s8 %v186
    %v188 = vlaneseq
    %v189 = vshrl.u32 %v188, 7
    %v190 = vsub.s32 %v187, %v189
    %v191 = vrot.slane %v177, %v190
    %v192 = vcombine.high %v184, %v184
    %v193 = vcombine.high %v191, %v191
    %v195 = vunpack.c.l.s4 1966171168
    %v196 = vunpack.c.0.s8 %v195
    %v197 = vlaneseq
    %v198 = vshrl.u32 %v197, 7
    %v199 = vsub.s32 %v196, %v198
    %v200 = vrot.slane %v184, %v199
    %v202 = vunpack.c.l.s4 1966171168
    %v203 = vunpack.c.0.s8 %v202
    %v204 = vlaneseq
    %v205 = vshrl.u32 %v204, 7
    %v206 = vsub.s32 %v203, %v205
    %v207 = vrot.slane %v191, %v206
    %v209 = vunpack.c.l.s4 1966171168
    %v210 = vunpack.c.0.s8 %v209
    %v211 = vlaneseq
    %v212 = vshrl.u32 %v211, 7
    %v213 = vsub.s32 %v210, %v212
    %v214 = vrot.slane %v192, %v213
    %v216 = vunpack.c.l.s4 1966171168
    %v217 = vunpack.c.0.s8 %v216
    %v218 = vlaneseq
    %v219 = vshrl.u32 %v218, 7
    %v220 = vsub.s32 %v217, %v219
    %v221 = vrot.slane %v193, %v220
    %v222 = vcombine.high %v200, %v200
    %v223 = vcombine.high %v207, %v207
    %v224 = vcombine.high %v214, %v214
    %v225 = vcombine.high %v221, %v221
    %v362 = vunpack.c.l.b16 %v48
    %v363 = vunpack.c.l.b16 %v49
    %v364 = vunpack.c.l.b16 %v50
    %v365 = vunpack.c.l.b16 %v51
    %v366 = vunpack.c.l.b16 %v52
    %v367 = vunpack.c.l.b16 %v53
    %v368 = vunpack.c.l.b16 %v54
    %v369 = vunpack.c.l.b16 %v55
    %v370 = vunpack.c.l.b16 %v56
    %v371 = vunpack.c.l.b16 %v57
    %v372 = vunpack.c.l.b16 %v58
    %v373 = vunpack.c.l.b16 %v59
    %v374 = vunpack.c.l.b16 %v60
    %v375 = vunpack.c.l.b16 %v61
    %v376 = vunpack.c.l.b16 %v62
    %v377 = vunpack.c.l.b16 %v63
    %v378 = vunpack.c.l.b16 %v64
    %v379 = vunpack.c.l.b16 %v65
    %v380 = vunpack.c.l.b16 %v66
    %v381 = vunpack.c.l.b16 %v67
    %v382 = vunpack.c.l.b16 %v68
    %v383 = vunpack.c.l.b16 %v69
    %v384 = vunpack.c.l.b16 %v70
    %v385 = vunpack.c.l.b16 %v71
    %v386 = vunpack.c.l.b16 %v72
    %v387 = vunpack.c.l.b16 %v73
    %v388 = vunpack.c.l.b16 %v74
    %v389 = vunpack.c.l.b16 %v75
    %v390 = vunpack.c.l.b16 %v76
    %v391 = vunpack.c.l.b16 %v77
    %v392 = vunpack.c.l.b16 %v78
    %v393 = vunpack.c.l.b16 %v79
    %v394 = vunpack.c.l.b16 %v80
    %v395 = vunpack.c.l.b16 %v81
    %v396 = vunpack.c.l.b16 %v82
    %v397 = vunpack.c.l.b16 %v83
    %v398 = vunpack.c.l.b16 %v84
    %v399 = vunpack.c.l.b16 %v85
    %v400 = vunpack.c.l.b16 %v86
    %v401 = vunpack.c.l.b16 %v87
    %v402 = vunpack.c.l.b16 %v88
    %v403 = vunpack.c.l.b16 %v89
    %v404 = vunpack.c.l.b16 %v90
    %v405 = vunpack.c.l.b16 %v91
    %v406 = vunpack.c.l.b16 %v92
    %v407 = vunpack.c.l.b16 %v93
    %v408 = vunpack.c.l.b16 %v94
    %v409 = vunpack.c.l.b16 %v95
    %v410 = vunpack.c.l.b16 %v96
    %v411 = vunpack.c.l.b16 %v97
    %v412 = vunpack.c.l.b16 %v98
    %v413 = vunpack.c.l.b16 %v99
    %v414 = vunpack.c.l.b16 %v100
    %v415 = vunpack.c.l.b16 %v101
    %v416 = vunpack.c.l.b16 %v102
    %v417 = vunpack.c.l.b16 %v103
    %v418 = vunpack.c.l.b16 %v104
    %v419 = vunpack.c.l.b16 %v105
    %v420 = vunpack.c.l.b16 %v106
    %v421 = vunpack.c.l.b16 %v107
    %v422 = vunpack.c.l.b16 %v108
    %v423 = vunpack.c.l.b16 %v109
    %v424 = vunpack.c.l.b16 %v110
    %v425 = vunpack.c.l.b16 %v111
    %v426 = vunpack.c.l.b16 %v112
    %v427 = vunpack.c.l.b16 %v113
    %v428 = vunpack.c.l.b16 %v114
    %v429 = vunpack.c.l.b16 %v115
    %v430 = vunpack.c.l.b16 %v116
    %v431 = vunpack.c.l.b16 %v117
    %v432 = vunpack.c.l.b16 %v118
    %v433 = vunpack.c.l.b16 %v119
    %v434 = vunpack.c.l.b16 %v120
    %v435 = vunpack.c.l.b16 %v121
    %v436 = vunpack.c.l.b16 %v122
    %v437 = vunpack.c.l.b16 %v123
    %v438 = vunpack.c.l.b16 %v124
    %v439 = vunpack.c.l.b16 %v125
    %v440 = vunpack.c.l.b16 %v126
    %v441 = vunpack.c.l.b16 %v127
    %v442 = vunpack.c.l.b16 %v128
    %v443 = vunpack.c.l.b16 %v129
    %v444 = vunpack.c.l.b16 %v130
    %v445 = vunpack.c.l.b16 %v131
    %v446 = vunpack.c.l.b16 %v132
    %v447 = vunpack.c.l.b16 %v133
    %v448 = vunpack.c.l.b16 %v134
    %v449 = vunpack.c.l.b16 %v135
    %v450 = vunpack.c.l.b16 %v136
    %v451 = vunpack.c.l.b16 %v137
    %v452 = vunpack.c.l.b16 %v138
    %v453 = vunpack.c.l.b16 %v139
    %v454 = vunpack.c.l.b16 %v140
    %v455 = vunpack.c.l.b16 %v141
    %v456 = vunpack.c.l.b16 %v142
    %v457 = vunpack.c.l.b16 %v143
    %v458 = vunpack.c.l.b16 %v144
    %v459 = vunpack.c.l.b16 %v145
    %v460 = vunpack.c.l.b16 %v146
    %v461 = vunpack.c.l.b16 %v147
    %v462 = vunpack.c.l.b16 %v148
    %v463 = vunpack.c.l.b16 %v149
    %v464 = vunpack.c.l.b16 %v150
    %v465 = vunpack.c.l.b16 %v151
    %v466 = vunpack.c.l.b16 %v152
    %v467 = vunpack.c.l.b16 %v153
    %v468 = vunpack.c.l.b16 %v154
    %v469 = vunpack.c.l.b16 %v155
    %v470 = vunpack.c.l.b16 %v156
    %v471 = vunpack.c.l.b16 %v157
    %v472 = vunpack.c.l.b16 %v158
    %v473 = vunpack.c.l.b16 %v159
    %v474 = vunpack.c.l.b16 %v160
    %v475 = vunpack.c.l.b16 %v161
    %v476 = vunpack.c.l.b16 %v162
    %v477 = vunpack.c.l.b16 %v163
    %v478 = vunpack.c.l.b16 %v164
    %v479 = vunpack.c.l.b16 %v165
    %v480 = vunpack.c.l.b16 %v166
    %v481 = vunpack.c.l.b16 %v167
    %v482 = vunpack.c.l.b16 %v168
    %v483 = vunpack.c.l.b16 %v169
    %v484 = vunpack.c.l.b16 %v170
    %v485 = vunpack.c.l.b16 %v171
    %v486 = vunpack.c.l.b16 %v172
    %v487 = vunpack.c.l.b16 %v173
    %v488 = vunpack.c.l.b16 %v174
    %v489 = vunpack.c.l.b16 %v175
    %v490 = vpack.c.b16 %v363, %v362
    %v491 = vpack.c.b16 %v365, %v364
    %v492 = vpack.c.b16 %v367, %v366
    %v493 = vpack.c.b16 %v369, %v368
    %v494 = vpack.c.b16 %v371, %v370
    %v495 = vpack.c.b16 %v373, %v372
    %v496 = vpack.c.b16 %v375, %v374
    %v497 = vpack.c.b16 %v377, %v376
    %v498 = vpack.c.b16 %v379, %v378
    %v499 = vpack.c.b16 %v381, %v380
    %v500 = vpack.c.b16 %v383, %v382
    %v501 = vpack.c.b16 %v385, %v384
    %v502 = vpack.c.b16 %v387, %v386
    %v503 = vpack.c.b16 %v389, %v388
    %v504 = vpack.c.b16 %v391, %v390
    %v505 = vpack.c.b16 %v393, %v392
    %v506 = vpack.c.b16 %v395, %v394
    %v507 = vpack.c.b16 %v397, %v396
    %v508 = vpack.c.b16 %v399, %v398
    %v509 = vpack.c.b16 %v401, %v400
    %v510 = vpack.c.b16 %v403, %v402
    %v511 = vpack.c.b16 %v405, %v404
    %v512 = vpack.c.b16 %v407, %v406
    %v513 = vpack.c.b16 %v409, %v408
    %v514 = vpack.c.b16 %v411, %v410
    %v515 = vpack.c.b16 %v413, %v412
    %v516 = vpack.c.b16 %v415, %v414
    %v517 = vpack.c.b16 %v417, %v416
    %v518 = vpack.c.b16 %v419, %v418
    %v519 = vpack.c.b16 %v421, %v420
    %v520 = vpack.c.b16 %v423, %v422
    %v521 = vpack.c.b16 %v425, %v424
    %v522 = vpack.c.b16 %v427, %v426
    %v523 = vpack.c.b16 %v429, %v428
    %v524 = vpack.c.b16 %v431, %v430
    %v525 = vpack.c.b16 %v433, %v432
    %v526 = vpack.c.b16 %v435, %v434
    %v527 = vpack.c.b16 %v437, %v436
    %v528 = vpack.c.b16 %v439, %v438
    %v529 = vpack.c.b16 %v441, %v440
    %v530 = vpack.c.b16 %v443, %v442
    %v531 = vpack.c.b16 %v445, %v444
    %v532 = vpack.c.b16 %v447, %v446
    %v533 = vpack.c.b16 %v449, %v448
    %v534 = vpack.c.b16 %v451, %v450
    %v535 = vpack.c.b16 %v453, %v452
    %v536 = vpack.c.b16 %v455, %v454
    %v537 = vpack.c.b16 %v457, %v456
    %v538 = vpack.c.b16 %v459, %v458
    %v539 = vpack.c.b16 %v461, %v460
    %v540 = vpack.c.b16 %v463, %v462
    %v541 = vpack.c.b16 %v465, %v464
    %v542 = vpack.c.b16 %v467, %v466
    %v543 = vpack.c.b16 %v469, %v468
    %v544 = vpack.c.b16 %v471, %v470
    %v545 = vpack.c.b16 %v473, %v472
    %v546 = vpack.c.b16 %v475, %v474
    %v547 = vpack.c.b16 %v477, %v476
    %v548 = vpack.c.b16 %v479, %v478
    %v549 = vpack.c.b16 %v481, %v480
    %v550 = vpack.c.b16 %v483, %v482
    %v551 = vpack.c.b16 %v485, %v484
    %v552 = vpack.c.b16 %v487, %v486
    %v553 = vpack.c.b16 %v489, %v488
    %618 = vmatprep.subr.bf16.mxu0 0
    %619 = vmatpush1.bf16.msra.mxu0 %v497
    %620 = vmatprep.subr.bf16.mxu0 0
    %621 = vmatpush1.bf16.msra.mxu0 %v496
    %622 = vmatprep.subr.bf16.mxu0 0
    %623 = vmatpush1.bf16.msra.mxu0 %v495
    %624 = vmatprep.subr.bf16.mxu0 0
    %625 = vmatpush1.bf16.msra.mxu0 %v494
    %626 = vmatprep.subr.bf16.mxu0 0
    %627 = vmatpush1.bf16.msra.mxu0 %v493
    %628 = vmatprep.subr.bf16.mxu0 0
    %629 = vmatpush1.bf16.msra.mxu0 %v492
    %630 = vmatprep.subr.bf16.mxu0 0
    %631 = vmatpush1.bf16.msra.mxu0 %v491
    %632 = vmatprep.subr.bf16.mxu0 0
    %633 = vmatpush1.bf16.msra.mxu0 %v490
    %634 = vmatprep.subr.bf16.mxu0 0
    %635 = vmatpush2.bf16.msra.mxu0 %v505
    %636 = vmatprep.subr.bf16.mxu0 0
    %637 = vmatpush2.bf16.msra.mxu0 %v504
    %638 = vmatprep.subr.bf16.mxu0 0
    %639 = vmatpush2.bf16.msra.mxu0 %v503
    %640 = vmatprep.subr.bf16.mxu0 0
    %641 = vmatpush2.bf16.msra.mxu0 %v502
    %642 = vmatprep.subr.bf16.mxu0 0
    %643 = vmatpush2.bf16.msra.mxu0 %v501
    %644 = vmatprep.subr.bf16.mxu0 0
    %645 = vmatpush2.bf16.msra.mxu0 %v500
    %646 = vmatprep.subr.bf16.mxu0 0
    %647 = vmatpush2.bf16.msra.mxu0 %v499
    %648 = vmatprep.subr.bf16.mxu0 0
    %649 = vmatpush2.bf16.msra.mxu0 %v498
    %650 = vmatprep.mubr.bf16.mxu0 %v214
    %651 = vmatmul.mubr.bf16.gmra.mxu0 %v200
    %v652 = vpop.f32.mrf.mxu0
    %v653 = vadd.f32 0.0, %v652
    %v654 = vpop.f32.mrf.mxu0
    %v655 = vpop.f32.mrf.mxu0
    %v656 = vpop.f32.mrf.mxu0
    %657 = vdwg.mxu0
    %658 = vmatprep.subr.bf16.mxu0 0
    %659 = vmatpush1.bf16.msra.mxu0 %v513
    %660 = vmatprep.subr.bf16.mxu0 0
    %661 = vmatpush1.bf16.msra.mxu0 %v512
    %662 = vmatprep.subr.bf16.mxu0 0
    %663 = vmatpush1.bf16.msra.mxu0 %v511
    %664 = vmatprep.subr.bf16.mxu0 0
    %665 = vmatpush1.bf16.msra.mxu0 %v510
    %666 = vmatprep.subr.bf16.mxu0 0
    %667 = vmatpush1.bf16.msra.mxu0 %v509
    %668 = vmatprep.subr.bf16.mxu0 0
    %669 = vmatpush1.bf16.msra.mxu0 %v508
    %670 = vmatprep.subr.bf16.mxu0 0
    %671 = vmatpush1.bf16.msra.mxu0 %v507
    %672 = vmatprep.subr.bf16.mxu0 0
    %673 = vmatpush1.bf16.msra.mxu0 %v506
    %674 = vmatprep.subr.bf16.mxu0 0
    %675 = vmatpush2.bf16.msra.mxu0 %v521
    %676 = vmatprep.subr.bf16.mxu0 0
    %677 = vmatpush2.bf16.msra.mxu0 %v520
    %678 = vmatprep.subr.bf16.mxu0 0
    %679 = vmatpush2.bf16.msra.mxu0 %v519
    %680 = vmatprep.subr.bf16.mxu0 0
    %681 = vmatpush2.bf16.msra.mxu0 %v518
    %682 = vmatprep.subr.bf16.mxu0 0
    %683 = vmatpush2.bf16.msra.mxu0 %v517
    %684 = vmatprep.subr.bf16.mxu0 0
    %685 = vmatpush2.bf16.msra.mxu0 %v516
    %686 = vmatprep.subr.bf16.mxu0 0
    %687 = vmatpush2.bf16.msra.mxu0 %v515
    %688 = vmatprep.subr.bf16.mxu0 0
    %689 = vmatpush2.bf16.msra.mxu0 %v514
    %690 = vmatprep.mubr.bf16.mxu0 %v224
    %691 = vmatmul.mubr.bf16.gmra.mxu0 %v222
    %v692 = vpop.f32.mrf.mxu0
    %v693 = vadd.f32 %v653, %v692
    %v694 = vpop.f32.mrf.mxu0
    %v695 = vpop.f32.mrf.mxu0
    %v696 = vpop.f32.mrf.mxu0
    %697 = vdwg.mxu0
    %698 = vmatprep.subr.bf16.mxu0 0
    %699 = vmatpush1.bf16.msra.mxu0 %v529
    %700 = vmatprep.subr.bf16.mxu0 0
    %701 = vmatpush1.bf16.msra.mxu0 %v528
    %702 = vmatprep.subr.bf16.mxu0 0
    %703 = vmatpush1.bf16.msra.mxu0 %v527
    %704 = vmatprep.subr.bf16.mxu0 0
    %705 = vmatpush1.bf16.msra.mxu0 %v526
    %706 = vmatprep.subr.bf16.mxu0 0
    %707 = vmatpush1.bf16.msra.mxu0 %v525
    %708 = vmatprep.subr.bf16.mxu0 0
    %709 = vmatpush1.bf16.msra.mxu0 %v524
    %710 = vmatprep.subr.bf16.mxu0 0
    %711 = vmatpush1.bf16.msra.mxu0 %v523
    %712 = vmatprep.subr.bf16.mxu0 0
    %713 = vmatpush1.bf16.msra.mxu0 %v522
    %714 = vmatprep.subr.bf16.mxu0 0
    %715 = vmatpush2.bf16.msra.mxu0 %v537
    %716 = vmatprep.subr.bf16.mxu0 0
    %717 = vmatpush2.bf16.msra.mxu0 %v536
    %718 = vmatprep.subr.bf16.mxu0 0
    %719 = vmatpush2.bf16.msra.mxu0 %v535
    %720 = vmatprep.subr.bf16.mxu0 0
    %721 = vmatpush2.bf16.msra.mxu0 %v534
    %722 = vmatprep.subr.bf16.mxu0 0
    %723 = vmatpush2.bf16.msra.mxu0 %v533
    %724 = vmatprep.subr.bf16.mxu0 0
    %725 = vmatpush2.bf16.msra.mxu0 %v532
    %726 = vmatprep.subr.bf16.mxu0 0
    %727 = vmatpush2.bf16.msra.mxu0 %v531
    %728 = vmatprep.subr.bf16.mxu0 0
    %729 = vmatpush2.bf16.msra.mxu0 %v530
    %730 = vmatprep.mubr.bf16.mxu0 %v221
    %731 = vmatmul.mubr.bf16.gmra.mxu0 %v207
    %v732 = vpop.f32.mrf.mxu0
    %v733 = vadd.f32 %v693, %v732
    %v734 = vpop.f32.mrf.mxu0
    %v735 = vpop.f32.mrf.mxu0
    %v736 = vpop.f32.mrf.mxu0
    %737 = vdwg.mxu0
    %738 = vmatprep.subr.bf16.mxu0 0
    %739 = vmatpush1.bf16.msra.mxu0 %v545
    %740 = vmatprep.subr.bf16.mxu0 0
    %741 = vmatpush1.bf16.msra.mxu0 %v544
    %742 = vmatprep.subr.bf16.mxu0 0
    %743 = vmatpush1.bf16.msra.mxu0 %v543
    %744 = vmatprep.subr.bf16.mxu0 0
    %745 = vmatpush1.bf16.msra.mxu0 %v542
    %746 = vmatprep.subr.bf16.mxu0 0
    %747 = vmatpush1.bf16.msra.mxu0 %v541
    %748 = vmatprep.subr.bf16.mxu0 0
    %749 = vmatpush1.bf16.msra.mxu0 %v540
    %750 = vmatprep.subr.bf16.mxu0 0
    %751 = vmatpush1.bf16.msra.mxu0 %v539
    %752 = vmatprep.subr.bf16.mxu0 0
    %753 = vmatpush1.bf16.msra.mxu0 %v538
    %754 = vmatprep.subr.bf16.mxu0 0
    %755 = vmatpush2.bf16.msra.mxu0 %v553
    %756 = vmatprep.subr.bf16.mxu0 0
    %757 = vmatpush2.bf16.msra.mxu0 %v552
    %758 = vmatprep.subr.bf16.mxu0 0
    %759 = vmatpush2.bf16.msra.mxu0 %v551
    %760 = vmatprep.subr.bf16.mxu0 0
    %761 = vmatpush2.bf16.msra.mxu0 %v550
    %762 = vmatprep.subr.bf16.mxu0 0
    %763 = vmatpush2.bf16.msra.mxu0 %v549
    %764 = vmatprep.subr.bf16.mxu0 0
    %765 = vmatpush2.bf16.msra.mxu0 %v548
    %766 = vmatprep.subr.bf16.mxu0 0
    %767 = vmatpush2.bf16.msra.mxu0 %v547
    %768 = vmatprep.subr.bf16.mxu0 0
    %769 = vmatpush2.bf16.msra.mxu0 %v546
    %770 = vmatprep.mubr.bf16.mxu0 %v225
    %771 = vmatmul.mubr.bf16.gmra.mxu0 %v223
    %v772 = vpop.f32.mrf.mxu0
    %v773 = vadd.f32 %v733, %v772
    %v774 = vpop.f32.mrf.mxu0
    %v775 = vpop.f32.mrf.mxu0
    %v776 = vpop.f32.mrf.mxu0
    %777 = vdwg.mxu0
    %v778 = vadd.f32 %v46, %v773
    %779 = vst [vmem:[#allocation2] sm:$0x3] %v778
    // Predicated region
    $region38: #{encoder_forward.1} parent=1 // pred_check
      %p780 = pneg %p41
    $region39: #{encoder_forward.1} parent=1 // pred_check_branch
      %782 = sbr.rel (%p780) target = $region41
    $region40: #{encoder_forward.1} parent=1 // pred_region
      %v783 = vld [vmem:[#allocation2] sm:$0x3]
      %v784 = vld [vmem:[%s2] sm:$0x1]
      %v786 = vlaneseq
      %v787 = vshrl.u32 %v786, 7
      %v788 = vsub.s32 0, %v787
      %v789 = vrot.slane %v784, %v788
      %v791 = vadd.f32 %v783, %v789
      %vm792 = vcmp.gt.f32.partialorder %v791, 0.0
      %v793 = vmul.f32 %v791, 0.2
      %v794 = vsel %vm792, %v791, %v793
      %v795 = vpack.c.bf16 %v794, %v794
      %v796 = vld [vmem:[%s3] sm:$0xf]
      %v797 = vld [vmem:[%s3 + $0x4] sm:$0xf]
      %v798 = vld [vmem:[%s3 + $0x8] sm:$0xf]
      %v799 = vld [vmem:[%s3 + $0xc] sm:$0xf]
      %v800 = vld [vmem:[%s3 + $0x10] sm:$0xf]
      %v801 = vld [vmem:[%s3 + $0x14] sm:$0xf]
      %v802 = vld [vmem:[%s3 + $0x18] sm:$0xf]
      %v803 = vld [vmem:[%s3 + $0x1c] sm:$0xf]
      %v804 = vld [vmem:[%s3 + $0x20] sm:$0xf]
      %v805 = vld [vmem:[%s3 + $0x24] sm:$0xf]
      %v806 = vld [vmem:[%s3 + $0x28] sm:$0xf]
      %v807 = vld [vmem:[%s3 + $0x2c] sm:$0xf]
      %v808 = vld [vmem:[%s3 + $0x30] sm:$0xf]
      %v809 = vld [vmem:[%s3 + $0x34] sm:$0xf]
      %v810 = vld [vmem:[%s3 + $0x38] sm:$0xf]
      %v811 = vld [vmem:[%s3 + $0x3c] sm:$0xf]
      %v812 = vld [vmem:[%s4] sm:$0x1]
      %v814 = vlaneseq
      %v815 = vshrl.u32 %v814, 7
      %v816 = vsub.s32 0, %v815
      %v817 = vrot.slane %v812, %v816
      %v835 = vunpack.c.l.b16 %v796
      %v836 = vunpack.c.l.b16 %v797
      %v837 = vunpack.c.l.b16 %v798
      %v838 = vunpack.c.l.b16 %v799
      %v839 = vunpack.c.l.b16 %v800
      %v840 = vunpack.c.l.b16 %v801
      %v841 = vunpack.c.l.b16 %v802
      %v842 = vunpack.c.l.b16 %v803
      %v843 = vunpack.c.l.b16 %v804
      %v844 = vunpack.c.l.b16 %v805
      %v845 = vunpack.c.l.b16 %v806
      %v846 = vunpack.c.l.b16 %v807
      %v847 = vunpack.c.l.b16 %v808
      %v848 = vunpack.c.l.b16 %v809
      %v849 = vunpack.c.l.b16 %v810
      %v850 = vunpack.c.l.b16 %v811
      %v851 = vpack.c.b16 %v836, %v835
      %v852 = vpack.c.b16 %v838, %v837
      %v853 = vpack.c.b16 %v840, %v839
      %v854 = vpack.c.b16 %v842, %v841
      %v855 = vpack.c.b16 %v844, %v843
      %v856 = vpack.c.b16 %v846, %v845
      %v857 = vpack.c.b16 %v848, %v847
      %v858 = vpack.c.b16 %v850, %v849
      %867 = vmatprep.subr.bf16.mxu0 0
      %868 = vmatpush1.bf16.msra.mxu0 %v858
      %869 = vmatprep.subr.bf16.mxu0 0
      %870 = vmatpush1.bf16.msra.mxu0 %v857
      %871 = vmatprep.subr.bf16.mxu0 0
      %872 = vmatpush1.bf16.msra.mxu0 %v856
      %873 = vmatprep.subr.bf16.mxu0 0
      %874 = vmatpush1.bf16.msra.mxu0 %v855
      %875 = vmatprep.subr.bf16.mxu0 0
      %876 = vmatpush1.bf16.msra.mxu0 %v854
      %877 = vmatprep.subr.bf16.mxu0 0
      %878 = vmatpush1.bf16.msra.mxu0 %v853
      %879 = vmatprep.subr.bf16.mxu0 0
      %880 = vmatpush1.bf16.msra.mxu0 %v852
      %881 = vmatprep.subr.bf16.mxu0 0
      %882 = vmatpush1.bf16.msra.mxu0 %v851
      %883 = vmatprep.subr.bf16.mxu0 0
      %884 = vmatpush2.bf16.msra.mxu0 0
      %885 = vmatprep.subr.bf16.mxu0 0
      %886 = vmatpush2.bf16.msra.mxu0 0
      %887 = vmatprep.subr.bf16.mxu0 0
      %888 = vmatpush2.bf16.msra.mxu0 0
      %889 = vmatprep.subr.bf16.mxu0 0
      %890 = vmatpush2.bf16.msra.mxu0 0
      %891 = vmatprep.subr.bf16.mxu0 0
      %892 = vmatpush2.bf16.msra.mxu0 0
      %893 = vmatprep.subr.bf16.mxu0 0
      %894 = vmatpush2.bf16.msra.mxu0 0
      %895 = vmatprep.subr.bf16.mxu0 0
      %896 = vmatpush2.bf16.msra.mxu0 0
      %897 = vmatprep.subr.bf16.mxu0 0
      %898 = vmatpush2.bf16.msra.mxu0 0
      %899 = vmatprep.mubr.bf16.mxu0 0
      %900 = vmatmul.mubr.bf16.gmra.mxu0 %v795
      %v901 = vpop.f32.mrf.mxu0
      %v902 = vadd.f32 %v817, %v901
      %v903 = vpop.f32.mrf.mxu0
      %v904 = vpop.f32.mrf.mxu0
      %v905 = vpop.f32.mrf.mxu0
      %906 = vdwg.mxu0
      %vm907 = vcmp.gt.f32.partialorder %v902, 0.0
      %v908 = vmul.f32 %v902, 0.2
      %v909 = vsel %vm907, %v902, %v908
      %v910 = vpack.c.bf16 %v909, %v909
      %v911 = vld [vmem:[%s5] sm:$0xf]
      %v912 = vld [vmem:[%s5 + $0x4] sm:$0xf]
      %v913 = vld [vmem:[%s5 + $0x8] sm:$0xf]
      %v914 = vld [vmem:[%s5 + $0xc] sm:$0xf]
      %v915 = vld [vmem:[%s5 + $0x10] sm:$0xf]
      %v916 = vld [vmem:[%s5 + $0x14] sm:$0xf]
      %v917 = vld [vmem:[%s5 + $0x18] sm:$0xf]
      %v918 = vld [vmem:[%s5 + $0x1c] sm:$0xf]
      %v919 = vld [vmem:[%s5 + $0x20] sm:$0xf]
      %v920 = vld [vmem:[%s5 + $0x24] sm:$0xf]
      %v921 = vld [vmem:[%s5 + $0x28] sm:$0xf]
      %v922 = vld [vmem:[%s5 + $0x2c] sm:$0xf]
      %v923 = vld [vmem:[%s5 + $0x30] sm:$0xf]
      %v924 = vld [vmem:[%s5 + $0x34] sm:$0xf]
      %v925 = vld [vmem:[%s5 + $0x38] sm:$0xf]
      %v926 = vld [vmem:[%s5 + $0x3c] sm:$0xf]
      %v927 = vld [vmem:[%s6] sm:$0x1]
      %v929 = vlaneseq
      %v930 = vshrl.u32 %v929, 7
      %v931 = vsub.s32 0, %v930
      %v932 = vrot.slane %v927, %v931
      %v950 = vunpack.c.l.b16 %v911
      %v951 = vunpack.c.l.b16 %v912
      %v952 = vunpack.c.l.b16 %v913
      %v953 = vunpack.c.l.b16 %v914
      %v954 = vunpack.c.l.b16 %v915
      %v955 = vunpack.c.l.b16 %v916
      %v956 = vunpack.c.l.b16 %v917
      %v957 = vunpack.c.l.b16 %v918
      %v958 = vunpack.c.l.b16 %v919
      %v959 = vunpack.c.l.b16 %v920
      %v960 = vunpack.c.l.b16 %v921
      %v961 = vunpack.c.l.b16 %v922
      %v962 = vunpack.c.l.b16 %v923
      %v963 = vunpack.c.l.b16 %v924
      %v964 = vunpack.c.l.b16 %v925
      %v965 = vunpack.c.l.b16 %v926
      %v966 = vpack.c.b16 %v951, %v950
      %v967 = vpack.c.b16 %v953, %v952
      %v968 = vpack.c.b16 %v955, %v954
      %v969 = vpack.c.b16 %v957, %v956
      %v970 = vpack.c.b16 %v959, %v958
      %v971 = vpack.c.b16 %v961, %v960
      %v972 = vpack.c.b16 %v963, %v962
      %v973 = vpack.c.b16 %v965, %v964
      %982 = vmatprep.subr.bf16.mxu0 0
      %983 = vmatpush1.bf16.msra.mxu0 %v973
      %984 = vmatprep.subr.bf16.mxu0 0
      %985 = vmatpush1.bf16.msra.mxu0 %v972
      %986 = vmatprep.subr.bf16.mxu0 0
      %987 = vmatpush1.bf16.msra.mxu0 %v971
      %988 = vmatprep.subr.bf16.mxu0 0
      %989 = vmatpush1.bf16.msra.mxu0 %v970
      %990 = vmatprep.subr.bf16.mxu0 0
      %991 = vmatpush1.bf16.msra.mxu0 %v969
      %992 = vmatprep.subr.bf16.mxu0 0
      %993 = vmatpush1.bf16.msra.mxu0 %v968
      %994 = vmatprep.subr.bf16.mxu0 0
      %995 = vmatpush1.bf16.msra.mxu0 %v967
      %996 = vmatprep.subr.bf16.mxu0 0
      %997 = vmatpush1.bf16.msra.mxu0 %v966
      %998 = vmatprep.subr.bf16.mxu0 0
      %999 = vmatpush2.bf16.msra.mxu0 0
      %1000 = vmatprep.subr.bf16.mxu0 0
      %1001 = vmatpush2.bf16.msra.mxu0 0
      %1002 = vmatprep.subr.bf16.mxu0 0
      %1003 = vmatpush2.bf16.msra.mxu0 0
      %1004 = vmatprep.subr.bf16.mxu0 0
      %1005 = vmatpush2.bf16.msra.mxu0 0
      %1006 = vmatprep.subr.bf16.mxu0 0
      %1007 = vmatpush2.bf16.msra.mxu0 0
      %1008 = vmatprep.subr.bf16.mxu0 0
      %1009 = vmatpush2.bf16.msra.mxu0 0
      %1010 = vmatprep.subr.bf16.mxu0 0
      %1011 = vmatpush2.bf16.msra.mxu0 0
      %1012 = vmatprep.subr.bf16.mxu0 0
      %1013 = vmatpush2.bf16.msra.mxu0 0
      %1014 = vmatprep.mubr.bf16.mxu0 0
      %1015 = vmatmul.mubr.bf16.gmra.mxu0 %v910
      %v1016 = vpop.f32.mrf.mxu0
      %v1017 = vadd.f32 %v932, %v1016
      %v1018 = vpop.f32.mrf.mxu0
      %v1019 = vpop.f32.mrf.mxu0
      %v1020 = vpop.f32.mrf.mxu0
      %1021 = vdwg.mxu0
      %1022 = vst [vmem:[%s7] sm:$0x3] %v1017
    $region41: #{encoder_forward.1} parent=1 // pred_fallthru
      _
    // Predicated region
    $region42: #{encoder_forward.1} parent=1 // pred_check
      _
    $region43: #{encoder_forward.1} parent=1 // pred_check_branch
      %1024 = sbr.rel (0) target = $region45
    $region44: #{encoder_forward.1} parent=1 // pred_region
      _
    $region45: #{encoder_forward.1} parent=1 // pred_fallthru
      _
    // Predicated region
    $region46: #{encoder_forward.1} parent=1 // pred_check
      _
    $region47: #{encoder_forward.1} parent=1 // pred_check_branch
      %1026 = sbr.rel (0) target = $region49
    $region48: #{encoder_forward.1} parent=1 // pred_region
      _
    $region49: #{encoder_forward.1} parent=1 // pred_fallthru
      _
    %1027 = vsyncpa [#allocation4], 1

</llo_original>
